<compile_context>
chip_gen: v7x
topology: tpu7x:2x2x1
jax: 0.10.0
libtpu: 0.0.40
codegen_flags: <defaults>
</compile_context>

<pallas_src>
import functools

import jax
import jax.numpy as jnp
from jax.experimental import pallas as pl
from jax.experimental.pallas import tpu as pltpu
from jax.scipy.linalg import block_diag

BASEWIDTH = 64
CARDINALITY = 32
DEPTH = 4
BN_EPS = 1e-5

_LANE = 128
_TM_TARGET = 512
_VMEM_LIMIT = 48 * 1024 * 1024


def _round_up(v, m):
    return ((v + m - 1) // m) * m


def _pick_tiling(m, target=_TM_TARGET):
    """Pick (tile_m, padded_m) with padded_m % tile_m == 0, avoiding row padding if possible."""
    if m <= target:
        return m, m
    for tm in (target, 384, 256, 128, 64, 32, 16, 8):
        if m % tm == 0:
            return tm, m
    return 256, _round_up(m, 256)   # rare fallback: pad rows


def _compiler_params():
    return pltpu.CompilerParams(
        dimension_semantics=("parallel",),
        vmem_limit_bytes=_VMEM_LIMIT,
    )


# --------------------------------------------------------------------------------------
# Pallas kernels
# --------------------------------------------------------------------------------------
def _mm_bias_act_kernel(x_ref, w_ref, b_ref, o_ref, *, relu):
    # y = act(x @ w + shift)  — 1x1 conv (BN scale folded into w) in bf16, f32 accumulation.
    acc = jnp.dot(x_ref[...], w_ref[...], preferred_element_type=jnp.float32)
    acc = acc + b_ref[...]
    if relu:
        acc = jnp.maximum(acc, 0.0)
    o_ref[...] = acc.astype(o_ref.dtype)


def _conv3x3_bn_relu_kernel(xp_ref, w_ref, b_ref, o_ref, *, stride, ho, wo):
    # Fused-im2col 3x3 conv: 9 shifted matmuls accumulated in f32, + shift, ReLU.
    # xp_ref: (1, H+2, W+2, C) spatially padded input tile (one image).
    # w_ref:  (9, C, Cout) per-tap dense weights (BN scale folded, block-diag over groups).
    cin = xp_ref.shape[-1]
    cout = w_ref.shape[-1]
    acc = jnp.zeros((ho * wo, cout), jnp.float32)
    for kh in range(3):
        for kw in range(3):
            if stride == 1:
                patch = xp_ref[0, pl.ds(kh, ho), pl.ds(kw, wo), :]
            else:
                # TODO(synk): stride>1 uses sublane-strided loads; not exercised by the demo.
                patch = xp_ref[0, pl.ds(kh, ho, stride), pl.ds(kw, wo, stride), :]
            acc = acc + jnp.dot(patch.reshape(ho * wo, cin), w_ref[kh * 3 + kw],
                                preferred_element_type=jnp.float32)
    y = jnp.maximum(acc + b_ref[...], 0.0)
    o_ref[...] = y.reshape(1, ho, wo, cout).astype(o_ref.dtype)


def _final_proj_kernel(y_ref, xs_ref, w3_ref, ws_ref, b_ref, o_ref):
    # y = relu(y2 @ w3 + xs @ ws + (shift3 + shift_s))  — conv3 + projection shortcut fused.
    acc = jnp.dot(y_ref[...], w3_ref[...], preferred_element_type=jnp.float32)
    acc = acc + jnp.dot(xs_ref[...], ws_ref[...], preferred_element_type=jnp.float32)
    o_ref[...] = jnp.maximum(acc + b_ref[...], 0.0).astype(o_ref.dtype)


def _final_identity_kernel(y_ref, r_ref, w3_ref, b_ref, o_ref):
    # y = relu(y2 @ w3 + shift3 + residual)  — conv3 + identity shortcut fused.
    acc = jnp.dot(y_ref[...], w3_ref[...], preferred_element_type=jnp.float32)
    acc = acc + r_ref[...].astype(jnp.float32)
    o_ref[...] = jnp.maximum(acc + b_ref[...], 0.0).astype(o_ref.dtype)


# --------------------------------------------------------------------------------------
# Pallas-call wrappers
# --------------------------------------------------------------------------------------
def matmul_bias_act(x2d, w, shift, *, relu, out_dtype=jnp.bfloat16):
    m, k = x2d.shape
    n = w.shape[1]
    tm, mp = _pick_tiling(m)
    xb = x2d.astype(jnp.bfloat16)
    if mp != m:
        xb = jnp.pad(xb, ((0, mp - m), (0, 0)))
    out = pl.pallas_call(
        functools.partial(_mm_bias_act_kernel, relu=relu),
        out_shape=jax.ShapeDtypeStruct((mp, n), out_dtype),
        grid=(mp // tm,),
        in_specs=[
            pl.BlockSpec((tm, k), lambda i: (i, 0)),
            pl.BlockSpec((k, n), lambda i: (0, 0)),
            pl.BlockSpec((1, n), lambda i: (0, 0)),
        ],
        out_specs=pl.BlockSpec((tm, n), lambda i: (i, 0)),
        compiler_params=_compiler_params(),
    )(xb, w.astype(jnp.bfloat16), shift.reshape(1, n).astype(jnp.float32))
    return out[:m] if mp != m else out


def conv3x3_bn_relu(xp_nhwc, taps, shift, *, stride, out_dtype=jnp.bfloat16):
    n, hp, wp, c = xp_nhwc.shape
    cout = taps.shape[-1]
    ho = (hp - 3) // stride + 1
    wo = (wp - 3) // stride + 1
    return pl.pallas_call(
        functools.partial(_conv3x3_bn_relu_kernel, stride=stride, ho=ho, wo=wo),
        out_shape=jax.ShapeDtypeStruct((n, ho, wo, cout), out_dtype),
        grid=(n,),
        in_specs=[
            pl.BlockSpec((1, hp, wp, c), lambda b: (b, 0, 0, 0)),
            pl.BlockSpec((9, c, cout), lambda b: (0, 0, 0)),
            pl.BlockSpec((1, cout), lambda b: (0, 0)),
        ],
        out_specs=pl.BlockSpec((1, ho, wo, cout), lambda b: (b, 0, 0, 0)),
        compiler_params=_compiler_params(),
    )(xp_nhwc.astype(jnp.bfloat16), taps.astype(jnp.bfloat16),
      shift.reshape(1, cout).astype(jnp.float32))


def final_1x1_add_relu(y2d, res2d, w3, shift, ws=None, out_dtype=jnp.float32):
    m, k3 = y2d.shape
    n = w3.shape[1]
    kr = res2d.shape[1]
    tm, mp = _pick_tiling(m)
    yb = y2d.astype(jnp.bfloat16)
    rb = res2d.astype(jnp.bfloat16)
    if mp != m:
        yb = jnp.pad(yb, ((0, mp - m), (0, 0)))
        rb = jnp.pad(rb, ((0, mp - m), (0, 0)))
    shift2 = shift.reshape(1, n).astype(jnp.float32)
    if ws is not None:
        kernel = _final_proj_kernel
        in_specs = [
            pl.BlockSpec((tm, k3), lambda i: (i, 0)),
            pl.BlockSpec((tm, kr), lambda i: (i, 0)),
            pl.BlockSpec((k3, n), lambda i: (0, 0)),
            pl.BlockSpec((kr, n), lambda i: (0, 0)),
            pl.BlockSpec((1, n), lambda i: (0, 0)),
        ]
        args = (yb, rb, w3.astype(jnp.bfloat16), ws.astype(jnp.bfloat16), shift2)
    else:
        kernel = _final_identity_kernel
        in_specs = [
            pl.BlockSpec((tm, k3), lambda i: (i, 0)),
            pl.BlockSpec((tm, n), lambda i: (i, 0)),
            pl.BlockSpec((k3, n), lambda i: (0, 0)),
            pl.BlockSpec((1, n), lambda i: (0, 0)),
        ]
        args = (yb, rb, w3.astype(jnp.bfloat16), shift2)
    out = pl.pallas_call(
        kernel,
        out_shape=jax.ShapeDtypeStruct((mp, n), out_dtype),
        grid=(mp // tm,),
        in_specs=in_specs,
        out_specs=pl.BlockSpec((tm, n), lambda i: (i, 0)),
        compiler_params=_compiler_params(),
    )(*args)
    return out[:m] if mp != m else out


# --------------------------------------------------------------------------------------
# Glue: BN folding and grouped-conv -> dense weight construction (channel padding to 128)
# --------------------------------------------------------------------------------------
def fold_bn(bn):
    gamma, beta, mean, var = bn
    scale = gamma / jnp.sqrt(var + BN_EPS)
    shift = beta - mean * scale
    return scale, shift


def conv1x1_to_dense(w, groups, scale, k_pad, n_pad):
    # w: (Cout, Cin//groups, 1, 1) -> (k_pad, n_pad) dense, block-diagonal over groups,
    # BN scale folded into the columns.  Padded rows/cols are zero.
    c_out, c_in_pg = w.shape[0], w.shape[1]
    c_in = c_in_pg * groups
    out_pg = c_out // groups
    wf = (w[:, :, 0, 0] * scale[:, None]).astype(jnp.float32)
    blocks = [wf[g * out_pg:(g + 1) * out_pg, :].T for g in range(groups)]
    dense = block_diag(*blocks) if groups > 1 else blocks[0]
    return jnp.pad(dense, ((0, k_pad - c_in), (0, n_pad - c_out)))


def conv3x3_to_taps(w, groups, scale, c_pad):
    # w: (Cout, Cin//groups, 3, 3) -> (9, c_pad, c_pad) per-tap dense block-diag weights
    # with BN scale folded; tap index = kh*3 + kw.
    c_out, c_in_pg = w.shape[0], w.shape[1]
    c_in = c_in_pg * groups
    out_pg = c_out // groups
    wf = (w * scale[:, None, None, None]).astype(jnp.float32)
    taps = []
    for kh in range(3):
        for kw in range(3):
            blocks = [wf[g * out_pg:(g + 1) * out_pg, :, kh, kw].T for g in range(groups)]
            dense = block_diag(*blocks) if groups > 1 else blocks[0]
            taps.append(jnp.pad(dense, ((0, c_pad - c_in), (0, c_pad - c_out))))
    return jnp.stack(taps, axis=0)


def _pad_channels(v, n_pad):
    return jnp.pad(v, (0, n_pad - v.shape[0]))


# --------------------------------------------------------------------------------------
# Parameters (deterministic synthetic init, shapes from the PyTorch __init__)
# --------------------------------------------------------------------------------------
def init_params(key, in_channels, out_channels, stride):
    c = CARDINALITY
    d = int(DEPTH * out_channels / BASEWIDTH)
    cmid = c * d
    cout4 = out_channels * 4

    def w_init(k, shape):
        fan_in = shape[1] * shape[2] * shape[3]
        return jax.random.normal(k, shape, jnp.float32) / jnp.sqrt(float(fan_in))

    def bn_init(k, ch):
        k1, k2, k3, k4 = jax.random.split(k, 4)
        gamma = jax.random.uniform(k1, (ch,), jnp.float32, 0.5, 1.5)
        beta = 0.1 * jax.random.normal(k2, (ch,), jnp.float32)
        mean = 0.1 * jax.random.normal(k3, (ch,), jnp.float32)
        var = jax.random.uniform(k4, (ch,), jnp.float32, 0.5, 1.5)
        return gamma, beta, mean, var

    ks = jax.random.split(key, 8)
    params = {
        "w1": w_init(ks[0], (cmid, in_channels // c, 1, 1)),
        "bn1": bn_init(ks[1], cmid),
        "w2": w_init(ks[2], (cmid, cmid // c, 3, 3)),
        "bn2": bn_init(ks[3], cmid),
        "w3": w_init(ks[4], (cout4, cmid, 1, 1)),
        "bn3": bn_init(ks[5], cout4),
    }
    has_shortcut = (stride != 1) or (in_channels != cout4)
    if has_shortcut:
        params["ws"] = w_init(ks[6], (cout4, in_channels, 1, 1))
        params["bns"] = bn_init(ks[7], cout4)
    return params, has_shortcut


# --------------------------------------------------------------------------------------
# Full forward pass (Pallas) and pure-JAX reference
# --------------------------------------------------------------------------------------
def resnext_forward_pallas(x_nchw, params, stride, has_shortcut):
    c = CARDINALITY
    x = jnp.transpose(x_nchw, (0, 2, 3, 1)).astype(jnp.float32)  # NHWC
    n, h, w, cin = x.shape
    cmid = params["w1"].shape[0]
    cout4 = params["w3"].shape[0]
    cmid_p = _round_up(cmid, _LANE)
    cout4_p = _round_up(cout4, _LANE)

    s1, b1 = fold_bn(params["bn1"])
    s2, b2 = fold_bn(params["bn2"])
    s3, b3 = fold_bn(params["bn3"])

    w1d = conv1x1_to_dense(params["w1"], c, s1, cin, cmid_p)       # (cin, cmid_p)
    w2t = conv3x3_to_taps(params["w2"], c, s2, cmid_p)             # (9, cmid_p, cmid_p)
    w3d = conv1x1_to_dense(params["w3"], 1, s3, cmid_p, cout4_p)   # (cmid_p, cout4_p)
    b1p = _pad_channels(b1, cmid_p)
    b2p = _pad_channels(b2, cmid_p)
    b3p = _pad_channels(b3, cout4_p)

    # ---- 1x1 grouped conv + BN + ReLU (block-diag dense matmul, bf16 / f32 acc) ----
    y1 = matmul_bias_act(x.reshape(-1, cin), w1d, b1p, relu=True)
    y1 = y1.reshape(n, h, w, cmid_p)

    # ---- 3x3 grouped conv (stride, pad=1) + BN + ReLU, im2col fused inside the kernel ----
    y1p = jnp.pad(y1, ((0, 0), (1, 1), (1, 1), (0, 0)))
    y2 = conv3x3_bn_relu(y1p, w2t, b2p, stride=stride)
    ho, wo = y2.shape[1], y2.shape[2]

    # ---- final 1x1 conv + BN + shortcut + residual add + ReLU, one fused kernel ----
    xs = x[:, ::stride, ::stride, :]                               # (n, ho, wo, cin)
    m_out = n * ho * wo
    if has_shortcut:
        ss, bs = fold_bn(params["bns"])
        wsd = conv1x1_to_dense(params["ws"], 1, ss, cin, cout4_p)  # (cin, cout4_p)
        shift = b3p + _pad_channels(bs, cout4_p)
        out = final_1x1_add_relu(y2.reshape(m_out, cmid_p),
                                 xs.reshape(m_out, cin), w3d, shift, ws=wsd)
    else:
        res = jnp.pad(xs, ((0, 0), (0, 0), (0, 0), (0, cout4_p - cin)))
        out = final_1x1_add_relu(y2.reshape(m_out, cmid_p),
                                 res.reshape(m_out, cout4_p), w3d, b3p, ws=None)

    out = out.reshape(n, ho, wo, cout4_p)[..., :cout4]
    return jnp.transpose(out, (0, 3, 1, 2))  # back to NCHW


def resnext_forward_ref(x_nchw, params, stride, has_shortcut):
    c = CARDINALITY

    def conv(x, w, s, pad, groups):
        return jax.lax.conv_general_dilated(
            x, w, (s, s), pad, feature_group_count=groups,
            dimension_numbers=("NCHW", "OIHW", "NCHW"),
            precision=jax.lax.Precision.HIGHEST,
        )

    def bn(x, p):
        gamma, beta, mean, var = (a[None, :, None, None] for a in p)
        return (x - mean) / jnp.sqrt(var + BN_EPS) * gamma + beta

    x = x_nchw.astype(jnp.float32)
    y = jax.nn.relu(bn(conv(x, params["w1"], 1, [(0, 0), (0, 0)], c), params["bn1"]))
    y = jax.nn.relu(bn(conv(y, params["w2"], stride, [(1, 1), (1, 1)], c), params["bn2"]))
    y = bn(conv(y, params["w3"], 1, [(0, 0), (0, 0)], 1), params["bn3"])
    if has_shortcut:
        s = bn(conv(x, params["ws"], stride, [(0, 0), (0, 0)], 1), params["bns"])
    else:
        s = x
    return jax.nn.relu(y + s)


# --------------------------------------------------------------------------------------
if __name__ == "__main__":
    # Small shapes consistent with the module's constraints:
    # in_channels % CARDINALITY == 0 and out_channels % 16 == 0 (so D >= 1).
    batch, in_channels, out_channels, hw, stride = 2, 32, 16, 8, 1

    key = jax.random.PRNGKey(0)
    kx, kp = jax.random.split(key)
    x = jax.random.normal(kx, (batch, in_channels, hw, hw), jnp.float32)

    params, has_shortcut = init_params(kp, in_channels, out_channels, stride)

    out = jax.block_until_ready(resnext_forward_pallas(x, params, stride, has_shortcut))
    ref = jax.block_until_ready(resnext_forward_ref(x, params, stride, has_shortcut))

    assert out.shape == ref.shape == (batch, out_channels * 4, hw // stride, hw // stride)
    max_err = jnp.max(jnp.abs(out - ref))
    # bf16 MXU matmuls vs f32/HIGHEST reference -> loosened tolerance.
    assert jnp.allclose(out, ref, atol=1e-1, rtol=1e-1), f"mismatch: max abs err {max_err}"
    print("KERNEL_OK")
</pallas_src>

<mosaic_0001>
module attributes {stable_mosaic.version = 11 : i64} {
  func.func @_mm_bias_act_kernel(%arg0: i32, %arg1: memref<128x32xbf16, #tpu.memory_space<vmem>>, %arg2: memref<32x128xbf16, #tpu.memory_space<vmem>>, %arg3: memref<1x128xf32, #tpu.memory_space<vmem>>, %arg4: memref<128x128xbf16, #tpu.memory_space<vmem>>) attributes {dimension_semantics = [#tpu.dimension_semantics<parallel>], iteration_bounds = array<i64: 1>, scalar_prefetch = 0 : i64, scratch_operands = 0 : i64, tpu.core_type = #tpu.core_type<tc>, window_params = [{transform_indices = @transform_0, window_bounds = array<i64: 128, 32>}, {pipeline_mode = #tpu.pipeline_mode<synchronous>, transform_indices = @transform_1, window_bounds = array<i64: 32, 128>}, {pipeline_mode = #tpu.pipeline_mode<synchronous>, transform_indices = @transform_2, window_bounds = array<i64: 1, 128>}, {transform_indices = @transform_3, window_bounds = array<i64: 128, 128>}]} {
    %c0 = arith.constant 0 : index
    %c0_0 = arith.constant 0 : index
    %0 = vector.load %arg1[%c0, %c0_0] : memref<128x32xbf16, #tpu.memory_space<vmem>>, vector<128x32xbf16>
    %c0_1 = arith.constant 0 : index
    %c0_2 = arith.constant 0 : index
    %1 = vector.load %arg2[%c0_1, %c0_2] : memref<32x128xbf16, #tpu.memory_space<vmem>>, vector<32x128xbf16>
    %cst = arith.constant dense<0.000000e+00> : vector<128x128xf32>
    %2 = tpu.matmul %0, %1, %cst {dimension_numbers = #tpu.dot_dimension_numbers<[1], [0], [0], [1], [0, 0, 1, 1], [], []>} : vector<128x32xbf16>, vector<32x128xbf16>, vector<128x128xf32> -> vector<128x128xf32>
    %c0_3 = arith.constant 0 : index
    %c0_4 = arith.constant 0 : index
    %3 = vector.load %arg3[%c0_3, %c0_4] : memref<1x128xf32, #tpu.memory_space<vmem>>, vector<1x128xf32>
    %4 = vector.broadcast %3 : vector<1x128xf32> to vector<128x128xf32>
    %5 = arith.addf %2, %4 : vector<128x128xf32>
    %cst_5 = arith.constant 0.000000e+00 : f32
    %6 = vector.broadcast %cst_5 : f32 to vector<128x128xf32>
    %7 = arith.maximumf %5, %6 : vector<128x128xf32>
    %8 = arith.truncf %7 : vector<128x128xf32> to vector<128x128xbf16>
    %c0_6 = arith.constant 0 : index
    %c0_7 = arith.constant 0 : index
    %9 = vector.load %arg4[%c0_6, %c0_7] : memref<128x128xbf16, #tpu.memory_space<vmem>>, vector<128x128xbf16>
    tpu.vector_store %arg4[%c0_6, %c0_7], %8 {strides = array<i32>} : memref<128x128xbf16, #tpu.memory_space<vmem>>, vector<128x128xbf16>,
    return
  }
  func.func @transform_0(%arg0: i32) -> (i32, i32) {
    %c0_i32 = arith.constant 0 : i32
    %c0_i32_0 = arith.constant 0 : i32
    return %arg0, %c0_i32 : i32, i32
  }
  func.func @transform_1(%arg0: i32) -> (i32, i32) {
    %c0_i32 = arith.constant 0 : i32
    %c0_i32_0 = arith.constant 0 : i32
    %c0_i32_1 = arith.constant 0 : i32
    return %c0_i32, %c0_i32_0 : i32, i32
  }
  func.func @transform_2(%arg0: i32) -> (i32, i32) {
    %c0_i32 = arith.constant 0 : i32
    %c0_i32_0 = arith.constant 0 : i32
    %c0_i32_1 = arith.constant 0 : i32
    return %c0_i32, %c0_i32_0 : i32, i32
  }
  func.func @transform_3(%arg0: i32) -> (i32, i32) {
    %c0_i32 = arith.constant 0 : i32
    %c0_i32_0 = arith.constant 0 : i32
    return %arg0, %c0_i32 : i32, i32
  }
}

</mosaic_0001>

<llo_original>
// kernel: tpu_custom_call.1
$region0: #{tpu_custom_call.1}
  #allocation0 [shape = 'u32[]', space=smem, size = 0x4, offset = 0x4, fixed_abs, tag = 'smem constant byte address 0x4 - core index']
  #allocation1 [shape = 'u32[144,128]{1,0:T(1,128)}', space=vmem, size = 0x12000, scoped, tag = 'internal scratch']
  %s0 = inlined_call_operand.vmem [shape: bf16[128,32], index: 0, kind: input, shape index: {}]
  %s1 = inlined_call_operand.vmem [shape: bf16[32,128], index: 1, kind: input, shape index: {}]
  %s2 = inlined_call_operand.vmem [shape: f32[1,128], index: 2, kind: input, shape index: {}]
  %s3 = inlined_call_operand.hbm [shape: bf16[128,128], index: 3, kind: output, shape index: {}]
  %s4 = sld [smem:[#allocation0]]
  $region22: #{tpu_custom_call.1} parent=0
    _
  %s6 = ssub.s32 1, %s4
  %s7 = scalar_select 0, %s6, %s4
  $region1: #{tpu_custom_call.1} parent=0
    #allocation2 [shape = 'u8[32768]{0}', space=vmem, size = 0x8000, scoped, tag = 'output window, operand 0, single buffered']
    #allocation3 [shape = 's32[1]{0}', space=sflag, size = 0x4, scoped, tag = 'scoped memory for tpu_custom_call.1']
    %8 = vsyncpa [#allocation3], 0
    // Predicated region
    $region2: #{tpu_custom_call.1} parent=1 // pred_check
      _
    $region3: #{tpu_custom_call.1} parent=1 // pred_check_branch
      %10 = sbr.rel (0) target = $region5
    $region4: #{tpu_custom_call.1} parent=1 // pred_region
      _
    $region5: #{tpu_custom_call.1} parent=1 // pred_fallthru
      _
    // Predicated region
    $region6: #{tpu_custom_call.1} parent=1 // pred_check
      _
    $region7: #{tpu_custom_call.1} parent=1 // pred_check_branch
      %12 = sbr.rel (0) target = $region9
    $region8: #{tpu_custom_call.1} parent=1 // pred_region
      _
    $region9: #{tpu_custom_call.1} parent=1 // pred_fallthru
      _
    // Predicated region
    $region10: #{tpu_custom_call.1} parent=1 // pred_check
      _
    $region11: #{tpu_custom_call.1} parent=1 // pred_check_branch
      %14 = sbr.rel (0) target = $region13
    $region12: #{tpu_custom_call.1} parent=1 // pred_region
      _
    $region13: #{tpu_custom_call.1} parent=1 // pred_fallthru
      _
    %v16 = vld [vmem:[%s0] sm:$0xf]
    %v17 = vld [vmem:[%s0 + $0x4] sm:$0xf]
    %v18 = vld [vmem:[%s0 + $0x8] sm:$0xf]
    %v19 = vld [vmem:[%s0 + $0xc] sm:$0xf]
    %v20 = vld [vmem:[%s0 + $0x10] sm:$0xf]
    %v21 = vld [vmem:[%s0 + $0x14] sm:$0xf]
    %v22 = vld [vmem:[%s0 + $0x18] sm:$0xf]
    %v23 = vld [vmem:[%s0 + $0x1c] sm:$0xf]
    %v24 = vld [vmem:[%s0 + $0x20] sm:$0xf]
    %v25 = vld [vmem:[%s0 + $0x24] sm:$0xf]
    %v26 = vld [vmem:[%s0 + $0x28] sm:$0xf]
    %v27 = vld [vmem:[%s0 + $0x2c] sm:$0xf]
    %v28 = vld [vmem:[%s0 + $0x30] sm:$0xf]
    %v29 = vld [vmem:[%s0 + $0x34] sm:$0xf]
    %v30 = vld [vmem:[%s0 + $0x38] sm:$0xf]
    %v31 = vld [vmem:[%s0 + $0x3c] sm:$0xf]
    %v32 = vld [vmem:[%s1] sm:$0xf]
    %v33 = vld [vmem:[%s1 + $0x4] sm:$0xf]
    %v34 = vld [vmem:[%s1 + $0x8] sm:$0xf]
    %v35 = vld [vmem:[%s1 + $0xc] sm:$0xf]
    %v36 = vld [vmem:[%s2] sm:$0x1]
    %v38 = vlaneseq
    %v39 = vshrl.u32 %v38, 7
    %v40 = vsub.s32 0, %v39
    %v41 = vrot.slane %v36, %v40
    %v59 = vunpack.c.l.b16 %v16
    %v60 = vunpack.c.l.b16 %v17
    %v61 = vunpack.c.l.b16 %v18
    %v62 = vunpack.c.l.b16 %v19
    %v63 = vunpack.c.l.b16 %v20
    %v64 = vunpack.c.l.b16 %v21
    %v65 = vunpack.c.l.b16 %v22
    %v66 = vunpack.c.l.b16 %v23
    %v67 = vunpack.c.l.b16 %v24
    %v68 = vunpack.c.l.b16 %v25
    %v69 = vunpack.c.l.b16 %v26
    %v70 = vunpack.c.l.b16 %v27
    %v71 = vunpack.c.l.b16 %v28
    %v72 = vunpack.c.l.b16 %v29
    %v73 = vunpack.c.l.b16 %v30
    %v74 = vunpack.c.l.b16 %v31
    %v75 = vpack.c.b16 %v60, %v59
    %v76 = vpack.c.b16 %v62, %v61
    %v77 = vpack.c.b16 %v64, %v63
    %v78 = vpack.c.b16 %v66, %v65
    %v79 = vpack.c.b16 %v68, %v67
    %v80 = vpack.c.b16 %v70, %v69
    %v81 = vpack.c.b16 %v72, %v71
    %v82 = vpack.c.b16 %v74, %v73
    %v87 = vunpack.c.l.b16 %v32
    %v88 = vunpack.c.l.b16 %v33
    %v89 = vunpack.c.l.b16 %v34
    %v90 = vunpack.c.l.b16 %v35
    %v91 = vpack.c.b16 %v88, %v87
    %v92 = vpack.c.b16 %v90, %v89
    %vm95 = vcmask 261120
    %v97 = vsel %vm95, %v75, 0
    %v100 = vsel %vm95, %v76, 0
    %v103 = vsel %vm95, %v77, 0
    %v106 = vsel %vm95, %v78, 0
    %v109 = vsel %vm95, %v79, 0
    %v112 = vsel %vm95, %v80, 0
    %v115 = vsel %vm95, %v81, 0
    %v118 = vsel %vm95, %v82, 0
    %120 = vmatprep.subr.bf16.mxu0 0
    %121 = vmatpush1.bf16.msra.mxu0 %v91
    %122 = vmatprep.subr.bf16.mxu0 0
    %123 = vmatpush1.bf16.msra.mxu0 %v92
    %124 = vmatprep.subr.bf16.mxu0 0
    %125 = vmatpush1.bf16.msra.mxu0 0
    %126 = vmatprep.subr.bf16.mxu0 0
    %127 = vmatpush1.bf16.msra.mxu0 0
    %128 = vmatprep.subr.bf16.mxu0 0
    %129 = vmatpush1.bf16.msra.mxu0 0
    %130 = vmatprep.subr.bf16.mxu0 0
    %131 = vmatpush1.bf16.msra.mxu0 0
    %132 = vmatprep.subr.bf16.mxu0 0
    %133 = vmatpush1.bf16.msra.mxu0 0
    %134 = vmatprep.subr.bf16.mxu0 0
    %135 = vmatpush1.bf16.msra.mxu0 0
    %136 = vmatprep.subr.bf16.mxu0 0
    %137 = vmatpush1.bf16.msra.mxu0 0
    %138 = vmatprep.subr.bf16.mxu0 0
    %139 = vmatpush1.bf16.msra.mxu0 0
    %140 = vmatprep.subr.bf16.mxu0 0
    %141 = vmatpush1.bf16.msra.mxu0 0
    %142 = vmatprep.subr.bf16.mxu0 0
    %143 = vmatpush1.bf16.msra.mxu0 0
    %144 = vmatprep.subr.bf16.mxu0 0
    %145 = vmatpush1.bf16.msra.mxu0 0
    %146 = vmatprep.subr.bf16.mxu0 0
    %147 = vmatpush1.bf16.msra.mxu0 0
    %148 = vmatprep.subr.bf16.mxu0 0
    %149 = vmatpush1.bf16.msra.mxu0 0
    %150 = vmatprep.subr.bf16.mxu0 0
    %151 = vmatpush1.bf16.msra.mxu0 0
    %152 = vmatprep.mubr.bf16.mxu0 0
    %153 = vmatmul.mubr.bf16.gmra.mrb[0].mxu0 %v97
    %v154 = vpop.f32.mrb[0].mxu0
    %v155 = vadd.f32 %v41, %v154
    %v156 = vpop.f32.mrb[0].mxu0
    %v157 = vpop.f32.mrb[0].mxu0
    %v158 = vadd.f32 %v41, %v157
    %v159 = vpop.f32.mrb[0].mxu0
    %160 = vmatprep.mubr.bf16.mxu0 0
    %161 = vmatmul.mubr.bf16.gmra.mrb[0].mxu0 %v100
    %v162 = vpop.f32.mrb[0].mxu0
    %v163 = vadd.f32 %v41, %v162
    %v164 = vpop.f32.mrb[0].mxu0
    %v165 = vpop.f32.mrb[0].mxu0
    %v166 = vadd.f32 %v41, %v165
    %v167 = vpop.f32.mrb[0].mxu0
    %168 = vmatprep.mubr.bf16.mxu0 0
    %169 = vmatmul.mubr.bf16.gmra.mrb[0].mxu0 %v103
    %v170 = vpop.f32.mrb[0].mxu0
    %v171 = vadd.f32 %v41, %v170
    %v172 = vpop.f32.mrb[0].mxu0
    %v173 = vpop.f32.mrb[0].mxu0
    %v174 = vadd.f32 %v41, %v173
    %v175 = vpop.f32.mrb[0].mxu0
    %176 = vmatprep.mubr.bf16.mxu0 0
    %177 = vmatmul.mubr.bf16.gmra.mrb[0].mxu0 %v106
    %v178 = vpop.f32.mrb[0].mxu0
    %v179 = vadd.f32 %v41, %v178
    %v180 = vpop.f32.mrb[0].mxu0
    %v181 = vpop.f32.mrb[0].mxu0
    %v182 = vadd.f32 %v41, %v181
    %v183 = vpop.f32.mrb[0].mxu0
    %184 = vmatprep.mubr.bf16.mxu0 0
    %185 = vmatmul.mubr.bf16.gmra.mrb[0].mxu0 %v109
    %v186 = vpop.f32.mrb[0].mxu0
    %v187 = vadd.f32 %v41, %v186
    %v188 = vpop.f32.mrb[0].mxu0
    %v189 = vpop.f32.mrb[0].mxu0
    %v190 = vadd.f32 %v41, %v189
    %v191 = vpop.f32.mrb[0].mxu0
    %192 = vmatprep.mubr.bf16.mxu0 0
    %193 = vmatmul.mubr.bf16.gmra.mrb[0].mxu0 %v112
    %v194 = vpop.f32.mrb[0].mxu0
    %v195 = vadd.f32 %v41, %v194
    %v196 = vpop.f32.mrb[0].mxu0
    %v197 = vpop.f32.mrb[0].mxu0
    %v198 = vadd.f32 %v41, %v197
    %v199 = vpop.f32.mrb[0].mxu0
    %200 = vmatprep.mubr.bf16.mxu0 0
    %201 = vmatmul.mubr.bf16.gmra.mrb[0].mxu0 %v115
    %v202 = vpop.f32.mrb[0].mxu0
    %v203 = vadd.f32 %v41, %v202
    %v204 = vpop.f32.mrb[0].mxu0
    %v205 = vpop.f32.mrb[0].mxu0
    %v206 = vadd.f32 %v41, %v205
    %v207 = vpop.f32.mrb[0].mxu0
    %208 = vmatprep.mubr.bf16.mxu0 0
    %209 = vmatmul.mubr.bf16.gmra.mrb[0].mxu0 %v118
    %v210 = vpop.f32.mrb[0].mxu0
    %v211 = vadd.f32 %v41, %v210
    %v212 = vpop.f32.mrb[0].mxu0
    %v213 = vpop.f32.mrb[0].mxu0
    %v214 = vadd.f32 %v41, %v213
    %v215 = vpop.f32.mrb[0].mxu0
    %216 = vdwg.mxu0
    %v217 = vmax.f32 %v155, 0.0
    %v218 = vmax.f32 %v158, 0.0
    %v219 = vmax.f32 %v163, 0.0
    %v220 = vmax.f32 %v166, 0.0
    %v221 = vmax.f32 %v171, 0.0
    %v222 = vmax.f32 %v174, 0.0
    %v223 = vmax.f32 %v179, 0.0
    %v224 = vmax.f32 %v182, 0.0
    %v225 = vmax.f32 %v187, 0.0
    %v226 = vmax.f32 %v190, 0.0
    %v227 = vmax.f32 %v195, 0.0
    %v228 = vmax.f32 %v198, 0.0
    %v229 = vmax.f32 %v203, 0.0
    %v230 = vmax.f32 %v206, 0.0
    %v231 = vmax.f32 %v211, 0.0
    %v232 = vmax.f32 %v214, 0.0
    %v233 = vpack.c.bf16 %v218, %v217
    %v234 = vpack.c.bf16 %v220, %v219
    %v235 = vpack.c.bf16 %v222, %v221
    %v236 = vpack.c.bf16 %v224, %v223
    %v237 = vpack.c.bf16 %v226, %v225
    %v238 = vpack.c.bf16 %v228, %v227
    %v239 = vpack.c.bf16 %v230, %v229
    %v240 = vpack.c.bf16 %v232, %v231
    %v249 = vunpack.c.l.b16 %v233
    %v250 = vunpack.c.h.b16 %v233
    %v251 = vunpack.c.l.b16 %v234
    %v252 = vunpack.c.h.b16 %v234
    %v253 = vunpack.c.l.b16 %v235
    %v254 = vunpack.c.h.b16 %v235
    %v255 = vunpack.c.l.b16 %v236
    %v256 = vunpack.c.h.b16 %v236
    %v257 = vunpack.c.l.b16 %v237
    %v258 = vunpack.c.h.b16 %v237
    %v259 = vunpack.c.l.b16 %v238
    %v260 = vunpack.c.h.b16 %v238
    %v261 = vunpack.c.l.b16 %v239
    %v262 = vunpack.c.h.b16 %v239
    %v263 = vunpack.c.l.b16 %v240
    %v264 = vunpack.c.h.b16 %v240
    %v265 = vpack.c.b16 %v249, %v249
    %v266 = vpack.c.b16 %v250, %v250
    %v267 = vpack.c.b16 %v251, %v251
    %v268 = vpack.c.b16 %v252, %v252
    %v269 = vpack.c.b16 %v253, %v253
    %v270 = vpack.c.b16 %v254, %v254
    %v271 = vpack.c.b16 %v255, %v255
    %v272 = vpack.c.b16 %v256, %v256
    %v273 = vpack.c.b16 %v257, %v257
    %v274 = vpack.c.b16 %v258, %v258
    %v275 = vpack.c.b16 %v259, %v259
    %v276 = vpack.c.b16 %v260, %v260
    %v277 = vpack.c.b16 %v261, %v261
    %v278 = vpack.c.b16 %v262, %v262
    %v279 = vpack.c.b16 %v263, %v263
    %v280 = vpack.c.b16 %v264, %v264
    %297 = vst [vmem:[#allocation2] sm:$0xf] %v265
    %298 = vst [vmem:[#allocation2 + $0x4] sm:$0xf] %v266
    %299 = vst [vmem:[#allocation2 + $0x8] sm:$0xf] %v267
    %300 = vst [vmem:[#allocation2 + $0xc] sm:$0xf] %v268
    %301 = vst [vmem:[#allocation2 + $0x10] sm:$0xf] %v269
    %302 = vst [vmem:[#allocation2 + $0x14] sm:$0xf] %v270
    %303 = vst [vmem:[#allocation2 + $0x18] sm:$0xf] %v271
    %304 = vst [vmem:[#allocation2 + $0x1c] sm:$0xf] %v272
    %305 = vst [vmem:[#allocation2 + $0x20] sm:$0xf] %v273
    %306 = vst [vmem:[#allocation2 + $0x24] sm:$0xf] %v274
    %307 = vst [vmem:[#allocation2 + $0x28] sm:$0xf] %v275
    %308 = vst [vmem:[#allocation2 + $0x2c] sm:$0xf] %v276
    %309 = vst [vmem:[#allocation2 + $0x30] sm:$0xf] %v277
    %310 = vst [vmem:[#allocation2 + $0x34] sm:$0xf] %v278
    %311 = vst [vmem:[#allocation2 + $0x38] sm:$0xf] %v279
    %312 = vst [vmem:[#allocation2 + $0x3c] sm:$0xf] %v280
    // Predicated region
    $region14: #{tpu_custom_call.1} parent=1 // pred_check
      _
    $region15: #{tpu_custom_call.1} parent=1 // pred_check_branch
      %314 = sbr.rel (0) target = $region17
    $region16: #{tpu_custom_call.1} parent=1 // pred_region
      %s316 = ssub.s32 1024, 1024
      %317 = vsyncadd [#allocation3], %s316
      %s318 = sshll.u32 [#allocation2], 4
      %s319 = int_to_ptr.vmem [resolvable:$true] %s318
      %324 = dma.vmem_to_hbm [thread:$0]  %s319, 1024, %s3, [#allocation3], 64, 64, 4
    $region17: #{tpu_custom_call.1} parent=1 // pred_fallthru
      _
    // Predicated region
    $region18: #{tpu_custom_call.1} parent=1 // pred_check
      _
    $region19: #{tpu_custom_call.1} parent=1 // pred_check_branch
      %326 = sbr.rel (0) target = $region21
    $region20: #{tpu_custom_call.1} parent=1 // pred_region
      %327 = dma.done [#allocation3], 1024
    $region21: #{tpu_custom_call.1} parent=1 // pred_fallthru
      _
    %328 = vsyncpa [#allocation3], 1

</llo_original>
